<compile_context>
chip_gen: v5e
topology: v5e:2x2
jax: 0.10.0
libtpu: 0.0.40
codegen_flags: <defaults>
</compile_context>

<pallas_src>
import functools
import math

import numpy as np

import jax
import jax.numpy as jnp
from jax.experimental import pallas as pl
from jax.experimental.pallas import tpu as pltpu


def _grad_sums_kernel(x_ref, mask_h_ref, mask_w_ref, out_h_ref, out_w_ref, *,
                      chunk_rows, lanes, sl_h, base_h, need_sel_w,
                      chunks_per_block, last_full_chunks, tail_elems, penalty):
    """Per-block per-lane partial sums of |dH| and |dW| (optionally squared).

    x_ref:      (tile_rows, lanes) block = whole (H, W) planes, row-major flat.
    mask_*_ref: (chunk_rows, lanes) f32 {0,1} edge-validity masks (DMA'd once).
    out_*_ref:  (1, 8, lanes) per-lane partial sums for this block.
    """
    # Loop-invariant lane-select conditions (tiny, hoisted out of the chunk loop).
    lane_idx = jax.lax.broadcasted_iota(jnp.int32, (1, lanes), 1)
    cond_h = (lane_idx < (lanes - sl_h)) if sl_h > 0 else None
    cond_w = (lane_idx < (lanes - 1)) if (lanes > 1 and need_sel_w) else None

    def _rowsum(d):
        # (chunk_rows, lanes) -> (8, lanes): vreg-aligned static slices + adds.
        s = d[0:8, :]
        for k in range(1, chunk_rows // 8):
            s = s + d[k * 8:(k + 1) * 8, :]
        return s

    def chunk_sums(r0, valid):
        cur = x_ref[pl.ds(r0, chunk_rows), :].astype(jnp.float32)
        if valid is not None:
            cur = jnp.where(valid, cur, 0.0)      # kill ragged-tail garbage
        mh = mask_h_ref[...]
        mw = mask_w_ref[...]

        # neighbour at flat + W (next image row): lane shift sl_h, row shift
        # base_h (+1 on the wrapped lanes).  Wrapped positions always lie on
        # the last image row of a plane -> zeroed by mask_h.
        if sl_h == 0:
            down = pltpu.roll(cur, chunk_rows - base_h, axis=0)
        else:
            d_a = pltpu.roll(cur, lanes - sl_h, axis=1)
            if base_h:
                d_a = pltpu.roll(d_a, chunk_rows - base_h, axis=0)
            d_b = pltpu.roll(d_a, chunk_rows - 1, axis=0)
            down = jnp.where(cond_h, d_a, d_b)
        dh = jnp.abs(down - cur)

        # neighbour at flat + 1 (next image column).
        if lanes > 1:
            r_a = pltpu.roll(cur, lanes - 1, axis=1)
            if need_sel_w:
                r_b = pltpu.roll(r_a, chunk_rows - 1, axis=0)
                right = jnp.where(cond_w, r_a, r_b)
            else:
                right = r_a
            dw = jnp.abs(right - cur)
        else:
            dw = jnp.zeros_like(cur)

        if penalty == 'l2':
            dh = dh * dh
            dw = dw * dw
        dh = dh * mh
        dw = dw * mw
        if valid is not None:
            vf = valid.astype(jnp.float32)
            dh = dh * vf
            dw = dw * vf
        return _rowsum(dh), _rowsum(dw)

    is_last = pl.program_id(0) == pl.num_programs(0) - 1
    n_full = jnp.where(is_last, jnp.int32(last_full_chunks),
                       jnp.int32(chunks_per_block))

    def body(ci, carry):
        acc_h, acc_w = carry
        r0 = pl.multiple_of(ci * chunk_rows, chunk_rows)
        dh_p, dw_p = chunk_sums(r0, None)
        return acc_h + dh_p, acc_w + dw_p

    zero = jnp.zeros((8, lanes), jnp.float32)
    acc_h, acc_w = jax.lax.fori_loop(0, n_full, body, (zero, zero))

    out_h_ref[0] = acc_h
    out_w_ref[0] = acc_w

    if tail_elems > 0:
        # Only the very last chunk of the last block is ragged; its valid
        # element count is static, so this path costs nothing elsewhere.
        @pl.when(is_last)
        def _():
            r0 = last_full_chunks * chunk_rows
            row_i = jax.lax.broadcasted_iota(jnp.int32, (chunk_rows, lanes), 0)
            col_i = jax.lax.broadcasted_iota(jnp.int32, (chunk_rows, lanes), 1)
            valid = (row_i * lanes + col_i) < tail_elems
            dh_p, dw_p = chunk_sums(r0, valid)
            out_h_ref[0] = out_h_ref[0] + dh_p
            out_w_ref[0] = out_w_ref[0] + dw_p


def gradient_loss_2d(x, penalty='l1', *,
                     target_block_bytes=8 * 1024 * 1024, target_chunk_rows=256):
    """Pallas TPU implementation of gradientLoss2d.forward.  x: (B, C, H, W)."""
    if penalty not in ('l1', 'l2'):
        raise ValueError(f"unsupported penalty: {penalty!r}")
    B, C, H, W = x.shape
    BC = B * C
    plane = H * W
    N = BC * plane
    itemsize = jnp.dtype(x.dtype).itemsize

    # --- layout: lane width of the folded (rows, lanes) view -----------------
    def _min_bc(c):        # smallest #planes whose folded row count is a multiple of 8
        return (8 * c) // math.gcd(plane, 8 * c)

    candidates = ([128] if N % 128 == 0 else []) + [W]
    lanes = None
    for c in candidates:
        if _min_bc(c) * plane <= (1 << 19):      # keep minimal chunk <= 512K elements
            lanes = c
            break
    if lanes is None:
        lanes = min(candidates, key=lambda c: _min_bc(c) * plane)
    min_bc = _min_bc(lanes)
    min_rows = min_bc * plane // lanes           # multiple of 8

    # --- chunk (inner-loop sub-tile): whole planes, ~target_chunk_rows rows ---
    chunk_bc = min_bc * max(1, target_chunk_rows // min_rows)
    bc_ceil_min = -(-BC // min_bc) * min_bc
    chunk_bc = min(chunk_bc, max(min_bc, bc_ceil_min))
    chunk_rows = chunk_bc * plane // lanes

    # --- block (grid step): whole chunks, ~target_block_bytes ----------------
    # TODO(synk): a single (H, W) plane larger than ~target_block_bytes would
    # need halo-row tiling; such planes are not handled here.
    planes_target = max(chunk_bc, target_block_bytes // max(1, plane * itemsize))
    tile_bc = chunk_bc * max(1, planes_target // chunk_bc)
    tile_bc = min(tile_bc, -(-BC // chunk_bc) * chunk_bc)
    if BC > chunk_bc:
        # keep >= 2 blocks so the parallel grid axis can use both v7x TensorCores
        half = -(-BC // 2)
        tile_bc = min(tile_bc, max(chunk_bc, (half // chunk_bc) * chunk_bc))
    chunks_per_block = tile_bc // chunk_bc
    num_blocks = -(-BC // tile_bc)
    tile_rows = tile_bc * plane // lanes
    total_rows = N // lanes

    last_bc = BC - (num_blocks - 1) * tile_bc
    last_full_chunks = last_bc // chunk_bc
    tail_elems = (last_bc - last_full_chunks * chunk_bc) * plane

    # --- host-precomputed edge-validity masks (f32 {0,1}); DMA'd once --------
    flat = (np.arange(chunk_rows, dtype=np.int64)[:, None] * lanes
            + np.arange(lanes, dtype=np.int64)[None, :])
    mask_h = jnp.asarray(((flat % plane) < (H - 1) * W).astype(np.float32))
    mask_w = jnp.asarray(((flat % W) < (W - 1)).astype(np.float32))

    x2 = x.reshape(total_rows, lanes)
    if num_blocks == 1 and tile_rows > total_rows:
        # tiny input (< one chunk multiple): pad rows so block <= array; the
        # padded planes are zeroed out again by the in-kernel tail mask.
        x2 = jnp.concatenate(
            [x2, jnp.zeros((tile_rows - total_rows, lanes), x2.dtype)], axis=0)

    # TODO(synk): for bf16 inputs on v6e/v7x the subtract/abs could stay in
    # bf16 (cast to f32 only at the accumulate); kept f32 so v5e is safe.
    kernel = functools.partial(
        _grad_sums_kernel,
        chunk_rows=chunk_rows, lanes=lanes,
        sl_h=W % lanes, base_h=W // lanes, need_sel_w=(lanes % W != 0),
        chunks_per_block=chunks_per_block, last_full_chunks=last_full_chunks,
        tail_elems=tail_elems, penalty=penalty)

    mask_bytes = 2 * chunk_rows * lanes * 4
    vmem_limit = int(max(2 * tile_rows * lanes * itemsize + 4 * mask_bytes
                         + (6 << 20), 16 << 20))

    partial_h, partial_w = pl.pallas_call(
        kernel,
        out_shape=(jax.ShapeDtypeStruct((num_blocks, 8, lanes), jnp.float32),
                   jax.ShapeDtypeStruct((num_blocks, 8, lanes), jnp.float32)),
        grid_spec=pltpu.PrefetchScalarGridSpec(
            num_scalar_prefetch=0,
            grid=(num_blocks,),
            in_specs=[
                pl.BlockSpec((tile_rows, lanes), lambda i: (i, 0)),
                pl.BlockSpec((chunk_rows, lanes), lambda i: (0, 0)),
                pl.BlockSpec((chunk_rows, lanes), lambda i: (0, 0)),
            ],
            out_specs=[
                pl.BlockSpec((1, 8, lanes), lambda i: (i, 0, 0)),
                pl.BlockSpec((1, 8, lanes), lambda i: (i, 0, 0)),
            ],
        ),
        compiler_params=pltpu.CompilerParams(
            dimension_semantics=("parallel",),
            vmem_limit_bytes=vmem_limit,
        ),
    )(x2, mask_h, mask_w)

    sum_dh = jnp.sum(partial_h)
    sum_dw = jnp.sum(partial_w)

    # torch: dH summed over channels, then mean over (B, H-1, W); same for dW.
    # TODO(synk): H == 1 or W == 1 gives a zero denominator (degenerate in torch too).
    mean_dh = sum_dh / jnp.float32(B * (H - 1) * W)
    mean_dw = sum_dw / jnp.float32(B * H * (W - 1))
    return mean_dh + mean_dw


def _reference_loss(x, penalty='l1'):
    x = x.astype(jnp.float32)
    dh = jnp.abs(x[:, :, 1:, :] - x[:, :, :-1, :])
    dw = jnp.abs(x[:, :, :, 1:] - x[:, :, :, :-1])
    if penalty == 'l2':
        dh = dh * dh
        dw = dw * dw
    dh = jnp.sum(dh, axis=1)
    dw = jnp.sum(dw, axis=1)
    return jnp.mean(dh) + jnp.mean(dw)


if __name__ == "__main__":
    key = jax.random.PRNGKey(0)
    B, C, H, W = 2, 4, 16, 16
    x = jax.random.normal(key, (B, C, H, W), dtype=jnp.float32)

    loss_l1 = jax.block_until_ready(gradient_loss_2d(x, penalty='l1'))
    loss_l2 = jax.block_until_ready(gradient_loss_2d(x, penalty='l2'))
    ref_l1 = _reference_loss(x, penalty='l1')
    ref_l2 = _reference_loss(x, penalty='l2')
    assert jnp.allclose(loss_l1, ref_l1, rtol=1e-5, atol=1e-5), (loss_l1, ref_l1)
    assert jnp.allclose(loss_l2, ref_l2, rtol=1e-5, atol=1e-5), (loss_l2, ref_l2)

    # Second shape: exercises a 2-block parallel grid, a partial last input
    # block and the in-kernel ragged-tail masking path.
    x_big = jax.random.normal(jax.random.PRNGKey(0), (3, 48, 16, 16), jnp.float32)
    loss_big = jax.block_until_ready(gradient_loss_2d(x_big, penalty='l1'))
    ref_big = _reference_loss(x_big, penalty='l1')
    assert jnp.allclose(loss_big, ref_big, rtol=1e-4, atol=1e-5), (loss_big, ref_big)

    print("KERNEL_OK")
</pallas_src>

<mosaic_0001>
module attributes {stable_mosaic.version = 11 : i64} {
  func.func @_grad_sums_kernel(%arg0: i32, %arg1: memref<16x128xf32, #tpu.memory_space<vmem>>, %arg2: memref<16x128xf32, #tpu.memory_space<vmem>>, %arg3: memref<16x128xf32, #tpu.memory_space<vmem>>, %arg4: memref<1x8x128xf32, #tpu.memory_space<vmem>>, %arg5: memref<1x8x128xf32, #tpu.memory_space<vmem>>) attributes {dimension_semantics = [#tpu.dimension_semantics<parallel>], iteration_bounds = array<i64: 1>, scalar_prefetch = 0 : i64, scratch_operands = 0 : i64, tpu.core_type = #tpu.core_type<tc>, window_params = [{transform_indices = @transform_0, window_bounds = array<i64: 16, 128>}, {pipeline_mode = #tpu.pipeline_mode<synchronous>, transform_indices = @transform_1, window_bounds = array<i64: 16, 128>}, {pipeline_mode = #tpu.pipeline_mode<synchronous>, transform_indices = @transform_2, window_bounds = array<i64: 16, 128>}, {transform_indices = @transform_3, window_bounds = array<i64: 1, 8, 128>}, {transform_indices = @transform_4, window_bounds = array<i64: 1, 8, 128>}]} {
    %0 = tpu.iota {dimensions = array<i32: 1>} : vector<1x128xi32>
    %c112_i32 = arith.constant 112 : i32
    %1 = vector.broadcast %c112_i32 : i32 to vector<1x128xi32>
    %2 = arith.cmpi slt, %0, %1 : vector<1x128xi32>
    %c0_i32 = arith.constant 0 : i32
    %3 = arith.cmpi eq, %arg0, %c0_i32 : i32
    %c1_i32 = arith.constant 1 : i32
    %c1_i32_0 = arith.constant 1 : i32
    %4 = arith.select %3, %c1_i32, %c1_i32_0 : i32
    %cst = arith.constant 0.000000e+00 : f32
    %5 = vector.broadcast %cst : f32 to vector<8x128xf32>
    %c0_i32_1 = arith.constant 0 : i32
    %6 = arith.subi %4, %c0_i32_1 : i32
    %7 = arith.addi %c0_i32_1, %6 : i32
    %c1_i32_2 = arith.constant 1 : i32
    %8:2 = scf.for %arg6 = %c0_i32_1 to %7 step %c1_i32_2 iter_args(%arg7 = %5, %arg8 = %5) -> (vector<8x128xf32>, vector<8x128xf32>)  : i32 {
      %c16_i32 = arith.constant 16 : i32
      %15 = arith.muli %arg6, %c16_i32 : i32
      %16 = tpu.assume_multiple %15, 16 : i32
      %17 = arith.index_cast %16 : i32 to index
      %c0_8 = arith.constant 0 : index
      %18 = vector.load %arg1[%17, %c0_8] : memref<16x128xf32, #tpu.memory_space<vmem>>, vector<16x128xf32>
      %c0_9 = arith.constant 0 : index
      %c0_10 = arith.constant 0 : index
      %19 = vector.load %arg2[%c0_9, %c0_10] : memref<16x128xf32, #tpu.memory_space<vmem>>, vector<16x128xf32>
      %c0_11 = arith.constant 0 : index
      %c0_12 = arith.constant 0 : index
      %20 = vector.load %arg3[%c0_11, %c0_12] : memref<16x128xf32, #tpu.memory_space<vmem>>, vector<16x128xf32>
      %c112_i32_13 = arith.constant 112 : i32
      %21 = tpu.dynamic_rotate %18 by %c112_i32_13 dim 1 : vector<16x128xf32>, i32 -> vector<16x128xf32>
      %c15_i32 = arith.constant 15 : i32
      %22 = tpu.dynamic_rotate %21 by %c15_i32 dim 0 : vector<16x128xf32>, i32 -> vector<16x128xf32>
      %23 = vector.shape_cast %2 : vector<1x128xi1> to vector<1x128xi1>
      %24 = vector.broadcast %23 : vector<1x128xi1> to vector<16x128xi1>
      %25 = arith.select %24, %21, %22 : vector<16x128xi1>, vector<16x128xf32>
      %26 = arith.subf %25, %18 : vector<16x128xf32>
      %27 = math.absf %26 : vector<16x128xf32>
      %c127_i32 = arith.constant 127 : i32
      %28 = tpu.dynamic_rotate %18 by %c127_i32 dim 1 : vector<16x128xf32>, i32 -> vector<16x128xf32>
      %29 = arith.subf %28, %18 : vector<16x128xf32>
      %30 = math.absf %29 : vector<16x128xf32>
      %31 = arith.mulf %27, %19 : vector<16x128xf32>
      %32 = arith.mulf %30, %20 : vector<16x128xf32>
      %33 = vector.extract_strided_slice %31 {offsets = [0, 0], sizes = [8, 128], strides = [1, 1]} : vector<16x128xf32> to vector<8x128xf32>
      %34 = vector.extract_strided_slice %31 {offsets = [8, 0], sizes = [8, 128], strides = [1, 1]} : vector<16x128xf32> to vector<8x128xf32>
      %35 = arith.addf %33, %34 : vector<8x128xf32>
      %36 = vector.extract_strided_slice %32 {offsets = [0, 0], sizes = [8, 128], strides = [1, 1]} : vector<16x128xf32> to vector<8x128xf32>
      %37 = vector.extract_strided_slice %32 {offsets = [8, 0], sizes = [8, 128], strides = [1, 1]} : vector<16x128xf32> to vector<8x128xf32>
      %38 = arith.addf %36, %37 : vector<8x128xf32>
      %39 = arith.addf %arg7, %35 : vector<8x128xf32>
      %40 = arith.addf %arg8, %38 : vector<8x128xf32>
      scf.yield %39, %40 : vector<8x128xf32>, vector<8x128xf32>
    }
    %c0 = arith.constant 0 : index
    %c0_3 = arith.constant 0 : index
    %c0_4 = arith.constant 0 : index
    %9 = vector.load %arg4[%c0, %c0_3, %c0_4] : memref<1x8x128xf32, #tpu.memory_space<vmem>>, vector<1x8x128xf32>
    %10 = vector.shape_cast %9 : vector<1x8x128xf32> to vector<8x128xf32>
    %11 = vector.shape_cast %8#0 : vector<8x128xf32> to vector<1x8x128xf32>
    tpu.vector_store %arg4[%c0, %c0_3, %c0_4], %11 {strides = array<i32>} : memref<1x8x128xf32, #tpu.memory_space<vmem>>, vector<1x8x128xf32>,
    %c0_5 = arith.constant 0 : index
    %c0_6 = arith.constant 0 : index
    %c0_7 = arith.constant 0 : index
    %12 = vector.load %arg5[%c0_5, %c0_6, %c0_7] : memref<1x8x128xf32, #tpu.memory_space<vmem>>, vector<1x8x128xf32>
    %13 = vector.shape_cast %12 : vector<1x8x128xf32> to vector<8x128xf32>
    %14 = vector.shape_cast %8#1 : vector<8x128xf32> to vector<1x8x128xf32>
    tpu.vector_store %arg5[%c0_5, %c0_6, %c0_7], %14 {strides = array<i32>} : memref<1x8x128xf32, #tpu.memory_space<vmem>>, vector<1x8x128xf32>,
    return
  }
  func.func @transform_0(%arg0: i32) -> (i32, i32) {
    %c0_i32 = arith.constant 0 : i32
    %c0_i32_0 = arith.constant 0 : i32
    return %arg0, %c0_i32 : i32, i32
  }
  func.func @transform_1(%arg0: i32) -> (i32, i32) {
    %c0_i32 = arith.constant 0 : i32
    %c0_i32_0 = arith.constant 0 : i32
    %c0_i32_1 = arith.constant 0 : i32
    return %c0_i32, %c0_i32_0 : i32, i32
  }
  func.func @transform_2(%arg0: i32) -> (i32, i32) {
    %c0_i32 = arith.constant 0 : i32
    %c0_i32_0 = arith.constant 0 : i32
    %c0_i32_1 = arith.constant 0 : i32
    return %c0_i32, %c0_i32_0 : i32, i32
  }
  func.func @transform_3(%arg0: i32) -> (i32, i32, i32) {
    %c0_i32 = arith.constant 0 : i32
    %c0_i32_0 = arith.constant 0 : i32
    %c0_i32_1 = arith.constant 0 : i32
    return %arg0, %c0_i32, %c0_i32_0 : i32, i32, i32
  }
  func.func @transform_4(%arg0: i32) -> (i32, i32, i32) {
    %c0_i32 = arith.constant 0 : i32
    %c0_i32_0 = arith.constant 0 : i32
    %c0_i32_1 = arith.constant 0 : i32
    return %arg0, %c0_i32, %c0_i32_0 : i32, i32, i32
  }
}

</mosaic_0001>

<llo_original>
// kernel: tpu_custom_call.1
$region0: #{tpu_custom_call.1}
  #allocation0 [shape = 'u32[]', space=smem, size = 0x4, offset = 0x4, fixed_abs, tag = 'smem constant byte address 0x4 - core index']
  #allocation1 [shape = 'u32[72,128]{1,0:T(1,128)}', space=vmem, size = 0x9000, scoped, tag = 'internal scratch']
  %s0 = inlined_call_operand.hbm [shape: f32[16,128], index: 0, kind: input, shape index: {}]
  %s1 = inlined_call_operand.hbm [shape: f32[16,128], index: 1, kind: input, shape index: {}]
  %s2 = inlined_call_operand.hbm [shape: f32[16,128], index: 2, kind: input, shape index: {}]
  %s3 = inlined_call_operand.hbm [shape: f32[1,8,128], index: 3, kind: output, shape index: {0}]
  %s4 = inlined_call_operand.hbm [shape: f32[1,8,128], index: 4, kind: output, shape index: {1}]
  %5 = xla_tuple %s3, %s4
  %s6 = sld [smem:[#allocation0]]
  $region42: #{tpu_custom_call.1} parent=0
    _
  %s8 = ssub.s32 1, %s6
  %s9 = scalar_select 0, %s8, %s6
  $region1: #{tpu_custom_call.1} parent=0
    #allocation2 [shape = 'u8[8192]{0}', space=vmem, size = 0x2000, scoped, tag = 'input window, operand 0, single buffered']
    #allocation3 [shape = 's32[1]{0}', space=sflag, size = 0x4, scoped, tag = 'scoped memory for tpu_custom_call.1']
    #allocation4 [shape = 's32[1]{0}', space=sflag, size = 0x4, scoped, tag = 'scoped memory for tpu_custom_call.1']
    #allocation5 [shape = 'u8[8192]{0}', space=vmem, size = 0x2000, scoped, tag = 'input window, operand 1, single buffered']
    #allocation6 [shape = 's32[1]{0}', space=sflag, size = 0x4, scoped, tag = 'scoped memory for tpu_custom_call.1']
    #allocation7 [shape = 'u8[8192]{0}', space=vmem, size = 0x2000, scoped, tag = 'input window, operand 2, single buffered']
    #allocation8 [shape = 'u8[4096]{0}', space=vmem, size = 0x1000, scoped, tag = 'output window, operand 0, single buffered']
    #allocation9 [shape = 'u8[4096]{0}', space=vmem, size = 0x1000, scoped, tag = 'output window, operand 1, single buffered']
    #allocation10 [shape = 's32[1]{0}', space=sflag, size = 0x4, scoped, tag = 'scoped memory for tpu_custom_call.1']
    %10 = vsyncpa [#allocation3], 0
    %11 = vsyncpa [#allocation6], 0
    %12 = vsyncpa [#allocation4], 0
    %13 = vsyncpa [#allocation10], 0
    // Predicated region
    $region2: #{tpu_custom_call.1} parent=1 // pred_check
      _
    $region3: #{tpu_custom_call.1} parent=1 // pred_check_branch
      %15 = sbr.rel (0) target = $region5
    $region4: #{tpu_custom_call.1} parent=1 // pred_region
      %17 = vsyncadd [#allocation3], 0
      %s18 = sshll.u32 %s0, 4
      %s19 = int_to_ptr.hbm [resolvable:$true] %s18
      %s20 = sshll.u32 [#allocation2], 4
      %s21 = int_to_ptr.vmem [resolvable:$true] %s20
      %26 = dma.hbm_to_vmem [thread:$0]  %s19, 256, %s21, [#allocation3], 128, 128, 8
    $region5: #{tpu_custom_call.1} parent=1 // pred_fallthru
      _
    // Predicated region
    $region6: #{tpu_custom_call.1} parent=1 // pred_check
      _
    $region7: #{tpu_custom_call.1} parent=1 // pred_check_branch
      %28 = sbr.rel (0) target = $region9
    $region8: #{tpu_custom_call.1} parent=1 // pred_region
      %30 = vsyncadd [#allocation6], 0
      %s31 = sshll.u32 %s1, 4
      %s32 = int_to_ptr.hbm [resolvable:$true] %s31
      %s33 = sshll.u32 [#allocation5], 4
      %s34 = int_to_ptr.vmem [resolvable:$true] %s33
      %39 = dma.hbm_to_vmem [thread:$0]  %s32, 256, %s34, [#allocation6], 128, 128, 8
    $region9: #{tpu_custom_call.1} parent=1 // pred_fallthru
      _
    // Predicated region
    $region10: #{tpu_custom_call.1} parent=1 // pred_check
      _
    $region11: #{tpu_custom_call.1} parent=1 // pred_check_branch
      %41 = sbr.rel (0) target = $region13
    $region12: #{tpu_custom_call.1} parent=1 // pred_region
      %43 = vsyncadd [#allocation6], 0
      %s44 = sshll.u32 %s2, 4
      %s45 = int_to_ptr.hbm [resolvable:$true] %s44
      %s46 = sshll.u32 [#allocation7], 4
      %s47 = int_to_ptr.vmem [resolvable:$true] %s46
      %52 = dma.hbm_to_vmem [thread:$0]  %s45, 256, %s47, [#allocation6], 128, 128, 8
    $region13: #{tpu_custom_call.1} parent=1 // pred_fallthru
      _
    // Predicated region
    $region14: #{tpu_custom_call.1} parent=1 // pred_check
      _
    $region15: #{tpu_custom_call.1} parent=1 // pred_check_branch
      %54 = sbr.rel (0) target = $region17
    $region16: #{tpu_custom_call.1} parent=1 // pred_region
      %56 = dma.done [#allocation3], 256
    $region17: #{tpu_custom_call.1} parent=1 // pred_fallthru
      _
    // Predicated region
    $region18: #{tpu_custom_call.1} parent=1 // pred_check
      _
    $region19: #{tpu_custom_call.1} parent=1 // pred_check_branch
      %58 = sbr.rel (0) target = $region21
    $region20: #{tpu_custom_call.1} parent=1 // pred_region
      %60 = dma.done [#allocation6], 256
    $region21: #{tpu_custom_call.1} parent=1 // pred_fallthru
      _
    // Predicated region
    $region22: #{tpu_custom_call.1} parent=1 // pred_check
      _
    $region23: #{tpu_custom_call.1} parent=1 // pred_check_branch
      %62 = sbr.rel (0) target = $region25
    $region24: #{tpu_custom_call.1} parent=1 // pred_region
      %64 = dma.done [#allocation6], 256
    $region25: #{tpu_custom_call.1} parent=1 // pred_fallthru
      _
    %v65 = vlaneseq
    %v66 = vand.u32 %v65, 127
    %vm67 = vcmp.lt.s32.totalorder %v66, 112
    %v68 = vld [vmem:[#allocation2] sm:$0xff]
    %v69 = vld [vmem:[#allocation2 + $0x8] sm:$0xff]
    %v70 = vld [vmem:[#allocation5] sm:$0xff]
    %v71 = vld [vmem:[#allocation5 + $0x8] sm:$0xff]
    %v72 = vld [vmem:[#allocation7] sm:$0xff]
    %v73 = vld [vmem:[#allocation7 + $0x8] sm:$0xff]
    %74 = vrot.lane.b32.xlu0 %v68, 112
    %v75 = vpop.permute.xlu0 %74
    %76 = vrot.lane.b32.xlu0 %v69, 112
    %v77 = vpop.permute.xlu0 %76
    %v78 = vrot.slane %v75, 1
    %v79 = vrot.slane %v77, 1
    %v80 = vlaneseq
    %v81 = vshrl.u32 %v80, 7
    %vm82 = vcmp.lt.s32.totalorder %v81, 7
    %v83 = vsel %vm82, %v78, %v79
    %v84 = vsel %vm82, %v79, %v78
    %v85 = vsel %vm67, 1, 0
    %vm86 = vcmp.eq.s32.totalorder %v85, 1
    %v87 = vsel %vm86, %v75, %v83
    %v88 = vsel %vm86, %v77, %v84
    %v89 = vsub.f32 %v87, %v68
    %v90 = vsub.f32 %v88, %v69
    %v91 = vand.u32 2147483647, %v89
    %v92 = vand.u32 2147483647, %v90
    %93 = vrot.lane.b32.xlu0 %v68, 127
    %v94 = vpop.permute.xlu0 %93
    %95 = vrot.lane.b32.xlu0 %v69, 127
    %v96 = vpop.permute.xlu0 %95
    %v97 = vsub.f32 %v94, %v68
    %v98 = vsub.f32 %v96, %v69
    %v99 = vand.u32 2147483647, %v97
    %v100 = vand.u32 2147483647, %v98
    %v101 = vmul.f32 %v91, %v70
    %v102 = vmul.f32 %v92, %v71
    %v103 = vmul.f32 %v99, %v72
    %v104 = vmul.f32 %v100, %v73
    %v105 = vadd.f32 %v101, %v102
    %v106 = vadd.f32 %v103, %v104
    %v107 = vadd.f32 %v105, 0.0
    %v108 = vadd.f32 %v106, 0.0
    %109 = vst [vmem:[#allocation8] sm:$0xff] %v107
    %110 = vst [vmem:[#allocation9] sm:$0xff] %v108
    // Predicated region
    $region26: #{tpu_custom_call.1} parent=1 // pred_check
      _
    $region27: #{tpu_custom_call.1} parent=1 // pred_check_branch
      %112 = sbr.rel (0) target = $region29
    $region28: #{tpu_custom_call.1} parent=1 // pred_region
      %114 = vsyncadd [#allocation4], 0
      %s116 = sshll.u32 [#allocation8], 4
      %s117 = int_to_ptr.vmem [resolvable:$true] %s116
      %s118 = sshll.u32 %s3, 4
      %s119 = int_to_ptr.hbm [resolvable:$true] %s118
      %121 = dma.vmem_to_hbm [thread:$0]  %s117, 128, %s119, [#allocation4]
    $region29: #{tpu_custom_call.1} parent=1 // pred_fallthru
      _
    // Predicated region
    $region30: #{tpu_custom_call.1} parent=1 // pred_check
      _
    $region31: #{tpu_custom_call.1} parent=1 // pred_check_branch
      %123 = sbr.rel (0) target = $region33
    $region32: #{tpu_custom_call.1} parent=1 // pred_region
      %125 = vsyncadd [#allocation10], 0
      %s127 = sshll.u32 [#allocation9], 4
      %s128 = int_to_ptr.vmem [resolvable:$true] %s127
      %s129 = sshll.u32 %s4, 4
      %s130 = int_to_ptr.hbm [resolvable:$true] %s129
      %132 = dma.vmem_to_hbm [thread:$0]  %s128, 128, %s130, [#allocation10]
    $region33: #{tpu_custom_call.1} parent=1 // pred_fallthru
      _
    // Predicated region
    $region34: #{tpu_custom_call.1} parent=1 // pred_check
      _
    $region35: #{tpu_custom_call.1} parent=1 // pred_check_branch
      %134 = sbr.rel (0) target = $region37
    $region36: #{tpu_custom_call.1} parent=1 // pred_region
      %136 = dma.done [#allocation4], 128
    $region37: #{tpu_custom_call.1} parent=1 // pred_fallthru
      _
    // Predicated region
    $region38: #{tpu_custom_call.1} parent=1 // pred_check
      _
    $region39: #{tpu_custom_call.1} parent=1 // pred_check_branch
      %138 = sbr.rel (0) target = $region41
    $region40: #{tpu_custom_call.1} parent=1 // pred_region
      %140 = dma.done [#allocation10], 128
    $region41: #{tpu_custom_call.1} parent=1 // pred_fallthru
      _
    %141 = vsyncpa [#allocation3], 1
    %142 = vsyncpa [#allocation6], 1
    %143 = vsyncpa [#allocation4], 1
    %144 = vsyncpa [#allocation10], 1

</llo_original>
